<compile_context>
chip_gen: v5e
topology: v5e:2x2
jax: 0.10.0
libtpu: 0.0.40
codegen_flags: <defaults>
</compile_context>

<pallas_src>
import functools

import jax
import jax.numpy as jnp
import numpy as np
from jax import lax
from jax.experimental import pallas as pl
from jax.experimental.pallas import tpu as pltpu

# ---------------------------------------------------------------------------
# Problem sizes (small, consistent with a graph-diffusion forward)
# ---------------------------------------------------------------------------
N = 64        # number of nodes per graph
F_IN = 16     # input / output node feature dim
H = 32        # hidden dim
C = 8         # context feature dim
NF = 8        # number of sinusoidal frequencies (time emb dim = 2*NF)
E = 128       # number of edges
ENC_IN = F_IN + C + 2 * NF   # 40 = stacked encoder input width


# ---------------------------------------------------------------------------
# Kernel 1: one-time dense adjacency build (shared graph, built once / forward)
#   adj[d, s] = #edges (s -> d), expressed as lane-dense one-hot matmuls.
# ---------------------------------------------------------------------------
def build_adj_kernel(edge_ref, adj_ref, *, n_nodes, n_edges):
    src = edge_ref[0:1, :]                                           # [1, E]
    dst = edge_ref[1:2, :]                                           # [1, E]
    node_ids = lax.broadcasted_iota(jnp.int32, (n_nodes, n_edges), 0)
    src_oh = (node_ids == src).astype(jnp.float32)                   # [N, E] lane-dense
    dst_oh = (node_ids == dst).astype(jnp.float32)                   # [N, E] lane-dense
    # adj = dst_oh @ src_oh^T  (contract over the edge axis)
    adj_ref[...] = lax.dot_general(
        dst_oh, src_oh,
        dimension_numbers=(((1,), (1,)), ((), ())),
        preferred_element_type=jnp.float32)                          # [N, N]


# ---------------------------------------------------------------------------
# Kernel 2: batched fused forward (encoder + message passing + readout)
#   One grid step = one graph / diffusion step; weights & adj VMEM-resident.
# ---------------------------------------------------------------------------
def fwd_kernel(xc_ref, t_ref, adj_ref, wenc_ref, wmsg_ref, wout_ref, bpack_ref,
               out_ref, *, nf, f_in):
    # Unpack the packed small operands (static slices, no runtime cost).
    b1 = bpack_ref[0:1, :]                                           # [1, H]
    bmsg = bpack_ref[1:2, :]                                         # [1, H]
    bout = bpack_ref[2:3, 0:f_in]                                    # [1, F_IN]
    freqs = bpack_ref[3:4, 0:nf]                                     # [1, NF]

    # ---- node encoder: single stacked matmul --------------------------------
    ang = t_ref[...] * freqs                                         # [N, NF]
    enc_in = jnp.concatenate(
        [xc_ref[...], jnp.sin(ang), jnp.cos(ang)], axis=-1)          # [N, 40]
    h = jnp.maximum(
        jnp.dot(enc_in, wenc_ref[...], preferred_element_type=jnp.float32) + b1,
        0.0)                                                         # [N, H]

    # ---- message passing: adj built once, reused every grid step ------------
    hm = jnp.dot(h, wmsg_ref[...], preferred_element_type=jnp.float32)     # [N, H]
    m = jnp.dot(adj_ref[...], hm, preferred_element_type=jnp.float32) + bmsg
    h2 = jnp.maximum(h + m, 0.0)                                     # [N, H]

    # ---- readout -------------------------------------------------------------
    out_ref[...] = (jnp.dot(h2, wout_ref[...], preferred_element_type=jnp.float32)
                    + bout)                                          # [N, F_IN]


# ---------------------------------------------------------------------------
# Wrapper = DiffusionWrapper.forward (batched over B diffusion steps / graphs;
# a single-graph call is just B == 1).
# ---------------------------------------------------------------------------
def diffusion_wrapper_forward(x, edge_index, time_steps, context, params):
    """x: [B, N, F_IN] (or [N, F_IN]), edge_index: [2, E] i32 (shared graph),
    time_steps: [B, N] (or [N]), context: [B, N, C] (or [N, C]).
    Returns [B, N, F_IN] (or [N, F_IN])."""
    wx, wt, wc, b1, wmsg, bmsg, wout, bout, freqs = params

    squeeze = (x.ndim == 2)
    if squeeze:
        x = x[None]
        time_steps = time_steps[None]
        context = context[None]
    B = x.shape[0]

    # ---- (A) one-time adjacency build (tiny grid-less kernel) --------------
    adj = pl.pallas_call(
        functools.partial(build_adj_kernel, n_nodes=N, n_edges=E),
        out_shape=jax.ShapeDtypeStruct((N, N), jnp.float32),
    )(edge_index.astype(jnp.int32))

    # ---- (B) wrapper-side layout plumbing (static concats / reshapes only) --
    w_enc = jnp.concatenate([wx, wc, wt], axis=0)                    # [40, H]
    bpack = jnp.concatenate(
        [b1,
         bmsg,
         jnp.pad(bout, ((0, 0), (0, H - F_IN))),
         jnp.pad(freqs, ((0, 0), (0, H - NF)))], axis=0)             # [4, H]
    xc = jnp.concatenate([x, context], axis=-1).reshape(B * N, F_IN + C)
    t_flat = time_steps.astype(jnp.float32).reshape(B * N, 1)

    # ---- (C) cost estimate (advisory, lets XLA schedule around the call) ----
    flops = 2 * B * (N * ENC_IN * H + N * H * H + N * N * H + N * H * F_IN)
    bytes_accessed = 4 * (xc.size + t_flat.size + adj.size + w_enc.size
                          + wmsg.size + wout.size + bpack.size + B * N * F_IN)
    cost = pl.CostEstimate(flops=flops,
                           transcendentals=2 * B * N * NF,
                           bytes_accessed=bytes_accessed)

    # ---- (D) batched fused forward -------------------------------------------
    const = lambda b: (0, 0)          # weights / adj: DMA once, VMEM-resident
    per_b = lambda b: (b, 0)          # per-graph activations / output
    out_flat = pl.pallas_call(
        functools.partial(fwd_kernel, nf=NF, f_in=F_IN),
        out_shape=jax.ShapeDtypeStruct((B * N, F_IN), jnp.float32),
        grid_spec=pltpu.PrefetchScalarGridSpec(
            num_scalar_prefetch=0,
            grid=(B,),
            in_specs=[
                pl.BlockSpec((N, F_IN + C), per_b),   # xc
                pl.BlockSpec((N, 1), per_b),          # t
                pl.BlockSpec((N, N), const),          # adj
                pl.BlockSpec((ENC_IN, H), const),     # w_enc
                pl.BlockSpec((H, H), const),          # wmsg
                pl.BlockSpec((H, F_IN), const),       # wout
                pl.BlockSpec((4, H), const),          # packed biases + freqs
            ],
            out_specs=pl.BlockSpec((N, F_IN), per_b),
        ),
        compiler_params=pltpu.CompilerParams(
            dimension_semantics=("parallel",)),       # shard batch on v7x's 2 TCs
        cost_estimate=cost,
    )(xc, t_flat, adj, w_enc, wmsg, wout, bpack)

    out = out_flat.reshape(B, N, F_IN)
    return out[0] if squeeze else out


# ---------------------------------------------------------------------------
# Pure-JAX reference (per graph) — original scatter-add adjacency and unsplit
# weights, so it validates the stacked-weight / materialized-adj reformulation.
# ---------------------------------------------------------------------------
def reference_forward_single(x, edge_index, time_steps, context, params):
    wx, wt, wc, b1, wmsg, bmsg, wout, bout, freqs = params
    src, dst = edge_index[0], edge_index[1]
    adj = jnp.zeros((N, N), jnp.float32).at[dst, src].add(1.0)
    ang = time_steps.astype(jnp.float32).reshape(N, 1) * freqs
    temb = jnp.concatenate([jnp.sin(ang), jnp.cos(ang)], axis=-1)
    h = jnp.maximum(x @ wx + temb @ wt + context @ wc + b1, 0.0)
    m = adj @ (h @ wmsg) + bmsg
    h2 = jnp.maximum(h + m, 0.0)
    return h2 @ wout + bout


# ---------------------------------------------------------------------------
# Deterministic parameter init
# ---------------------------------------------------------------------------
def init_params(key):
    ks = jax.random.split(key, 8)

    def lin(k, fan_in, shape):
        return jax.random.normal(k, shape, jnp.float32) / np.sqrt(fan_in)

    wx = lin(ks[0], F_IN, (F_IN, H))
    wt = lin(ks[1], 2 * NF, (2 * NF, H))
    wc = lin(ks[2], C, (C, H))
    b1 = jnp.zeros((1, H), jnp.float32)
    wmsg = lin(ks[3], H, (H, H))
    bmsg = jnp.zeros((1, H), jnp.float32)
    wout = lin(ks[4], H, (H, F_IN))
    bout = jnp.zeros((1, F_IN), jnp.float32)
    freqs = jnp.exp(-jnp.arange(NF, dtype=jnp.float32) *
                    (np.log(10000.0) / NF)).reshape(1, NF)
    return (wx, wt, wc, b1, wmsg, bmsg, wout, bout, freqs)


if __name__ == "__main__":
    key = jax.random.PRNGKey(0)
    k_x, k_e, k_t, k_c, k_p = jax.random.split(key, 5)

    B = 8  # batch of diffusion steps / graphs sharing one edge_index
    x = jax.random.normal(k_x, (B, N, F_IN), jnp.float32)
    edge_index = jax.random.randint(k_e, (2, E), 0, N, jnp.int32)
    time_steps = jax.random.randint(k_t, (B, N), 0, 1000, jnp.int32)
    context = jax.random.normal(k_c, (B, N, C), jnp.float32)
    params = init_params(k_p)

    out = jax.block_until_ready(
        diffusion_wrapper_forward(x, edge_index, time_steps, context, params))

    ref = jax.vmap(
        lambda xb, tb, cb: reference_forward_single(xb, edge_index, tb, cb, params)
    )(x, time_steps, context)
    ref = jax.block_until_ready(ref)

    np.testing.assert_allclose(np.asarray(out), np.asarray(ref),
                               rtol=1e-3, atol=1e-3)
    print("KERNEL_OK")
</pallas_src>

<mosaic_0001>
module attributes {stable_mosaic.version = 11 : i64} {
  func.func @build_adj_kernel(%arg0: memref<2x128xi32, #tpu.memory_space<vmem>>, %arg1: memref<64x64xf32, #tpu.memory_space<vmem>>) attributes {dimension_semantics = [], scalar_prefetch = 0 : i64, scratch_operands = 0 : i64, tpu.core_type = #tpu.core_type<tc>} {
    %c0 = arith.constant 0 : index
    %c0_0 = arith.constant 0 : index
    %0 = vector.load %arg0[%c0, %c0_0] : memref<2x128xi32, #tpu.memory_space<vmem>>, vector<1x128xi32>
    %c1 = arith.constant 1 : index
    %c0_1 = arith.constant 0 : index
    %1 = vector.load %arg0[%c1, %c0_1] : memref<2x128xi32, #tpu.memory_space<vmem>>, vector<1x128xi32>
    %2 = tpu.iota {dimensions = array<i32: 0>} : vector<64x128xi32>
    %3 = vector.broadcast %0 : vector<1x128xi32> to vector<64x128xi32>
    %4 = arith.cmpi eq, %2, %3 : vector<64x128xi32>
    %5 = arith.extui %4 : vector<64x128xi1> to vector<64x128xi32>
    %6 = arith.sitofp %5 : vector<64x128xi32> to vector<64x128xf32>
    %7 = vector.broadcast %1 : vector<1x128xi32> to vector<64x128xi32>
    %8 = arith.cmpi eq, %2, %7 : vector<64x128xi32>
    %9 = arith.extui %8 : vector<64x128xi1> to vector<64x128xi32>
    %10 = arith.sitofp %9 : vector<64x128xi32> to vector<64x128xf32>
    %cst = arith.constant dense<0.000000e+00> : vector<64x64xf32>
    %11 = tpu.matmul %10, %6, %cst {dimension_numbers = #tpu.dot_dimension_numbers<[1], [1], [0], [0], [0, 0, 1, 0], [], []>} : vector<64x128xf32>, vector<64x128xf32>, vector<64x64xf32> -> vector<64x64xf32>
    %c0_2 = arith.constant 0 : index
    %c0_3 = arith.constant 0 : index
    %12 = vector.load %arg1[%c0_2, %c0_3] : memref<64x64xf32, #tpu.memory_space<vmem>>, vector<64x64xf32>
    tpu.vector_store %arg1[%c0_2, %c0_3], %11 {strides = array<i32>} : memref<64x64xf32, #tpu.memory_space<vmem>>, vector<64x64xf32>,
    return
  }
}

</mosaic_0001>

<llo_original>
// kernel: tpu_custom_call.1
$region0: #{tpu_custom_call.1}
  #allocation0 [shape = 'u32[]', space=smem, size = 0x4, offset = 0x4, fixed_abs, tag = 'smem constant byte address 0x4 - core index']
  #allocation1 [shape = 'u32[72,128]{1,0:T(1,128)}', space=vmem, size = 0x9000, scoped, tag = 'internal scratch']
  %s0 = inlined_call_operand.hbm [shape: s32[2,128], index: 0, kind: input, shape index: {}]
  %s1 = inlined_call_operand.hbm [shape: f32[64,64], index: 1, kind: output, shape index: {}]
  %s2 = sld [smem:[#allocation0]]
  $region18: #{tpu_custom_call.1} parent=0
    _
  %s4 = ssub.s32 1, %s2
  %s5 = scalar_select 0, %s4, %s2
  $region1: #{tpu_custom_call.1} parent=0
    #allocation2 [shape = 'u8[1024]{0}', space=vmem, size = 0x400, scoped, tag = 'input window, operand 0, single buffered']
    #allocation3 [shape = 's32[1]{0}', space=sflag, size = 0x4, scoped, tag = 'scoped memory for tpu_custom_call.1']
    #allocation4 [shape = 's32[1]{0}', space=sflag, size = 0x4, scoped, tag = 'scoped memory for tpu_custom_call.1']
    #allocation5 [shape = 'u8[32768]{0}', space=vmem, size = 0x8000, scoped, tag = 'output window, operand 0, single buffered']
    %6 = vsyncpa [#allocation3], 0
    %7 = vsyncpa [#allocation4], 0
    // Predicated region
    $region2: #{tpu_custom_call.1} parent=1 // pred_check
      _
    $region3: #{tpu_custom_call.1} parent=1 // pred_check_branch
      %9 = sbr.rel (0) target = $region5
    $region4: #{tpu_custom_call.1} parent=1 // pred_region
      %11 = vsyncadd [#allocation3], 0
      %s13 = sshll.u32 %s0, 4
      %s14 = int_to_ptr.hbm [resolvable:$true] %s13
      %s15 = sshll.u32 [#allocation2], 4
      %s16 = int_to_ptr.vmem [resolvable:$true] %s15
      %18 = dma.hbm_to_vmem [thread:$0]  %s14, 32, %s16, [#allocation3]
    $region5: #{tpu_custom_call.1} parent=1 // pred_fallthru
      _
    // Predicated region
    $region6: #{tpu_custom_call.1} parent=1 // pred_check
      _
    $region7: #{tpu_custom_call.1} parent=1 // pred_check_branch
      %20 = sbr.rel (0) target = $region9
    $region8: #{tpu_custom_call.1} parent=1 // pred_region
      %22 = dma.done [#allocation3], 32
    $region9: #{tpu_custom_call.1} parent=1 // pred_fallthru
      _
    %v23 = vld [vmem:[#allocation2] sm:$0x1]
    %v24 = vld [vmem:[#allocation2 + $0x1] sm:$0x1]
    %v25 = vlaneseq
    %v26 = vshrl.u32 %v25, 7
    %v27 = vadd.s32 %v26, 8
    %v28 = vadd.s32 %v26, 16
    %v29 = vadd.s32 %v26, 24
    %v30 = vadd.s32 %v26, 32
    %v31 = vadd.s32 %v26, 40
    %v32 = vadd.s32 %v26, 48
    %v33 = vadd.s32 %v26, 56
    %v34 = vperm.slane %v23, 0
    %vm35 = vcmp.eq.s32.totalorder %v26, %v34
    %vm36 = vcmp.eq.s32.totalorder %v27, %v34
    %vm37 = vcmp.eq.s32.totalorder %v28, %v34
    %vm38 = vcmp.eq.s32.totalorder %v29, %v34
    %vm39 = vcmp.eq.s32.totalorder %v30, %v34
    %vm40 = vcmp.eq.s32.totalorder %v31, %v34
    %vm41 = vcmp.eq.s32.totalorder %v32, %v34
    %vm42 = vcmp.eq.s32.totalorder %v33, %v34
    %v43 = vsel %vm35, 1, 0
    %v44 = vsel %vm36, 1, 0
    %v45 = vsel %vm37, 1, 0
    %v46 = vsel %vm38, 1, 0
    %v47 = vsel %vm39, 1, 0
    %v48 = vsel %vm40, 1, 0
    %v49 = vsel %vm41, 1, 0
    %v50 = vsel %vm42, 1, 0
    %v51 = vcvt.s32.f32 %v43
    %v52 = vcvt.s32.f32 %v44
    %v53 = vcvt.s32.f32 %v45
    %v54 = vcvt.s32.f32 %v46
    %v55 = vcvt.s32.f32 %v47
    %v56 = vcvt.s32.f32 %v48
    %v57 = vcvt.s32.f32 %v49
    %v58 = vcvt.s32.f32 %v50
    %v59 = vperm.slane %v24, 0
    %vm60 = vcmp.eq.s32.totalorder %v26, %v59
    %vm61 = vcmp.eq.s32.totalorder %v27, %v59
    %vm62 = vcmp.eq.s32.totalorder %v28, %v59
    %vm63 = vcmp.eq.s32.totalorder %v29, %v59
    %vm64 = vcmp.eq.s32.totalorder %v30, %v59
    %vm65 = vcmp.eq.s32.totalorder %v31, %v59
    %vm66 = vcmp.eq.s32.totalorder %v32, %v59
    %vm67 = vcmp.eq.s32.totalorder %v33, %v59
    %v68 = vsel %vm60, 1, 0
    %v69 = vsel %vm61, 1, 0
    %v70 = vsel %vm62, 1, 0
    %v71 = vsel %vm63, 1, 0
    %v72 = vsel %vm64, 1, 0
    %v73 = vsel %vm65, 1, 0
    %v74 = vsel %vm66, 1, 0
    %v75 = vsel %vm67, 1, 0
    %v76 = vcvt.s32.f32 %v68
    %v77 = vcvt.s32.f32 %v69
    %v78 = vcvt.s32.f32 %v70
    %v79 = vcvt.s32.f32 %v71
    %v80 = vcvt.s32.f32 %v72
    %v81 = vcvt.s32.f32 %v73
    %v82 = vcvt.s32.f32 %v74
    %v83 = vcvt.s32.f32 %v75
    %84 = vmatpush.xpose.msra.mxu0 0.0
    %85 = vmatpush.xpose.msra.mxu0 0.0
    %86 = vmatpush.xpose.msra.mxu0 0.0
    %87 = vmatpush.xpose.msra.mxu0 0.0
    %88 = vmatpush.xpose.msra.mxu0 0.0
    %89 = vmatpush.xpose.msra.mxu0 0.0
    %90 = vmatpush.xpose.msra.mxu0 0.0
    %91 = vmatpush.xpose.msra.mxu0 0.0
    %92 = vmatpush.xpose.msra.mxu0 %v58
    %93 = vmatpush.xpose.msra.mxu0 %v57
    %94 = vmatpush.xpose.msra.mxu0 %v56
    %95 = vmatpush.xpose.msra.mxu0 %v55
    %96 = vmatpush.xpose.msra.mxu0 %v54
    %97 = vmatpush.xpose.msra.mxu0 %v53
    %98 = vmatpush.xpose.msra.mxu0 %v52
    %99 = vmatpush.xpose.msra.mxu0 %v51
    %100 = vmatmul.f32.gmra.mxu0 %v76
    %v101 = vpop.f32.mrf.mxu0
    %v102 = vadd.f32 0.0, %v101
    %103 = vmatmul.f32.gmra.mxu0 %v77
    %v104 = vpop.f32.mrf.mxu0
    %v105 = vadd.f32 0.0, %v104
    %106 = vmatmul.f32.gmra.mxu0 %v78
    %v107 = vpop.f32.mrf.mxu0
    %v108 = vadd.f32 0.0, %v107
    %109 = vmatmul.f32.gmra.mxu0 %v79
    %v110 = vpop.f32.mrf.mxu0
    %v111 = vadd.f32 0.0, %v110
    %112 = vmatmul.f32.gmra.mxu0 %v80
    %v113 = vpop.f32.mrf.mxu0
    %v114 = vadd.f32 0.0, %v113
    %115 = vmatmul.f32.gmra.mxu0 %v81
    %v116 = vpop.f32.mrf.mxu0
    %v117 = vadd.f32 0.0, %v116
    %118 = vmatmul.f32.gmra.mxu0 %v82
    %v119 = vpop.f32.mrf.mxu0
    %v120 = vadd.f32 0.0, %v119
    %121 = vmatmul.f32.gmra.mxu0 %v83
    %v122 = vpop.f32.mrf.mxu0
    %v123 = vadd.f32 0.0, %v122
    %124 = vdwg.mxu0
    %vm125 = vcmask 523264
    %126 = vst.msk [vmem:[#allocation5] sm:$0xff] %vm125, %v102
    %127 = vst.msk [vmem:[#allocation5 + $0x8] sm:$0xff] %vm125, %v105
    %128 = vst.msk [vmem:[#allocation5 + $0x10] sm:$0xff] %vm125, %v108
    %129 = vst.msk [vmem:[#allocation5 + $0x18] sm:$0xff] %vm125, %v111
    %130 = vst.msk [vmem:[#allocation5 + $0x20] sm:$0xff] %vm125, %v114
    %131 = vst.msk [vmem:[#allocation5 + $0x28] sm:$0xff] %vm125, %v117
    %132 = vst.msk [vmem:[#allocation5 + $0x30] sm:$0xff] %vm125, %v120
    %133 = vst.msk [vmem:[#allocation5 + $0x38] sm:$0xff] %vm125, %v123
    // Predicated region
    $region10: #{tpu_custom_call.1} parent=1 // pred_check
      _
    $region11: #{tpu_custom_call.1} parent=1 // pred_check_branch
      %135 = sbr.rel (0) target = $region13
    $region12: #{tpu_custom_call.1} parent=1 // pred_region
      %137 = vsyncadd [#allocation4], 0
      %s138 = sshll.u32 [#allocation5], 4
      %s139 = int_to_ptr.vmem [resolvable:$true] %s138
      %s140 = sshll.u32 %s1, 4
      %s141 = int_to_ptr.hbm [resolvable:$true] %s140
      %146 = dma.vmem_to_hbm [thread:$0]  %s139, 1024, %s141, [#allocation4], 128, 128, 8
    $region13: #{tpu_custom_call.1} parent=1 // pred_fallthru
      _
    // Predicated region
    $region14: #{tpu_custom_call.1} parent=1 // pred_check
      _
    $region15: #{tpu_custom_call.1} parent=1 // pred_check_branch
      %148 = sbr.rel (0) target = $region17
    $region16: #{tpu_custom_call.1} parent=1 // pred_region
      %150 = dma.done [#allocation4], 1024
    $region17: #{tpu_custom_call.1} parent=1 // pred_fallthru
      _
    %151 = vsyncpa [#allocation3], 1
    %152 = vsyncpa [#allocation4], 1

</llo_original>
